<compile_context>
chip_gen: v7x
topology: tpu7x:2x2x1
jax: 0.10.0
libtpu: 0.0.40
codegen_flags: <defaults>
</compile_context>

<pallas_src>
import math
from functools import partial

import jax
import jax.numpy as jnp
from jax.experimental import pallas as pl
from jax.experimental.pallas import tpu as pltpu

SELU_ALPHA = 1.6732632423543772
SELU_SCALE = 1.0507009873554805


def _selu(x):
    return SELU_SCALE * jnp.where(x > 0, x, SELU_ALPHA * (jnp.exp(x) - 1.0))


def _round_up(n, m):
    return ((n + m - 1) // m) * m


def _cdiv(a, b):
    return (a + b - 1) // b


def _block_diag(W, G):
    """G copies of W on the diagonal of a (G*fi, G*fo) zero matrix."""
    if G == 1:
        return W
    fi, fo = W.shape
    out = jnp.zeros((G * fi, G * fo), W.dtype)
    for g in range(G):
        out = out.at[g * fi:(g + 1) * fi, g * fo:(g + 1) * fo].set(W)
    return out


def mlp_kernel(x_ref, w0_ref, b0_ref, wmid_ref, bmid_ref, w5_ref, b5_ref,
               out_ref, *, compute_dtype, n_mid):
    """Fused 6-layer MLP (Linear -> SELU x5 -> Linear) on one batch tile.

    All weights are block-diagonal-packed (G samples per row), the last layer
    is zero-padded so the bias-add, the concat-with-zeros and lane padding are
    folded into a single full-lane-dense matmul + store.
    """
    def layer(h, W, b, act):
        y = jnp.dot(h.astype(compute_dtype), W,
                    preferred_element_type=jnp.float32) + b
        return _selu(y) if act else y

    h = layer(x_ref[...], w0_ref[...], b0_ref[...], True)
    for i in range(n_mid):                      # static unrolled loop (n_mid=4)
        h = layer(h, wmid_ref[i], bmid_ref[i], True)
    out_ref[...] = layer(h, w5_ref[...], b5_ref[...], False).astype(out_ref.dtype)


def init_mlp_params(key, dim, cond_dim=0, out_dim=None, w=64, time_varying=False):
    """Deterministic init mirroring torch.nn.Linear default (uniform +/-1/sqrt(fan_in)).

    Weights are stored as (in_features, out_features)."""
    if out_dim is None:
        out_dim = dim
    in_dim = dim + cond_dim + (1 if time_varying else 0)
    layer_dims = [(in_dim, w), (w, w), (w, w), (w, w), (w, w), (w, out_dim)]

    params = []
    for (fan_in, fan_out) in layer_dims:
        key, kw, kb = jax.random.split(key, 3)
        bound = 1.0 / math.sqrt(fan_in)
        W = jax.random.uniform(kw, (fan_in, fan_out), jnp.float32, -bound, bound)
        b = jax.random.uniform(kb, (fan_out,), jnp.float32, -bound, bound)
        params.append((W, b))
    return params


def mlp_forward(x, params, cond_dim, out_dim, *, use_bf16=True, batch_tile=4096,
                group=4):
    """Fused Pallas MLP forward. Returns (B, out_dim + cond_dim) float32.

    bf16 operands (f32 accumulation) are the default; pass use_bf16=False for
    bit-tight f32 results. `group` packs that many samples per vreg row via
    block-diagonal weights (4 fills the 256-wide MXU on v6e/v7x)."""
    B, feat = x.shape
    w = params[1][0].shape[0]                   # hidden width (64)
    total_out = out_dim + cond_dim
    n_mid = len(params) - 2
    G = max(1, int(group))
    compute_dtype = jnp.bfloat16 if use_bf16 else jnp.float32

    # --- geometry ---------------------------------------------------------
    feat_pad = _round_up(feat, 8)                       # 13 -> 16
    lane_unit = max(_cdiv(128, G), 8)
    out_pad = _round_up(total_out, lane_unit)           # 12 -> 32 (G=4 => 128 lanes)

    rows_needed = _cdiv(B, G)                           # packed rows required
    tbp_cap = max(8, (batch_tile // G) // 8 * 8)        # packed rows per tile cap
    # Keep >=2 grid steps when there is enough work (v7x: 2 TensorCores).
    tbp = max(8, min(tbp_cap, _round_up(_cdiv(rows_needed, 2), 8)))
    rows_pad = _round_up(rows_needed, tbp)
    B_pad = rows_pad * G
    grid = (rows_pad // tbp,)

    # --- inputs: pad + lane-pack (bf16 cast happens in the wrapper) --------
    x_p = x.astype(compute_dtype)
    x_p = jnp.pad(x_p, ((0, B_pad - B), (0, feat_pad - feat)))
    x_packed = x_p.reshape(rows_pad, G * feat_pad)

    # --- weights: block-diagonal pack, fold bias/concat/lane-pad into L5 ---
    W0, b0 = params[0]
    W0p = jnp.pad(W0, ((0, feat_pad - feat), (0, 0)))
    W0_bd = _block_diag(W0p, G).astype(compute_dtype)            # (G*16, G*64)
    b0_t = jnp.tile(b0, G).reshape(1, -1).astype(jnp.float32)    # (1, G*64)

    Wmid = jnp.stack([_block_diag(Wm, G) for (Wm, _) in params[1:1 + n_mid]]
                     ).astype(compute_dtype)                     # (4, G*64, G*64)
    bmid = jnp.stack([jnp.tile(bm, G).reshape(1, -1)
                      for (_, bm) in params[1:1 + n_mid]]).astype(jnp.float32)

    W5, b5 = params[-1]
    W5p = jnp.pad(W5, ((0, 0), (0, out_pad - out_dim)))          # zeros => concat+pad
    b5p = jnp.pad(b5, ((0, out_pad - out_dim),))
    W5_bd = _block_diag(W5p, G).astype(compute_dtype)            # (G*64, G*32)
    b5_t = jnp.tile(b5p, G).reshape(1, -1).astype(jnp.float32)   # (1, G*32)

    in_specs = [
        pl.BlockSpec((tbp, G * feat_pad), lambda i: (i, 0)),
        pl.BlockSpec(W0_bd.shape, lambda i: (0, 0)),
        pl.BlockSpec(b0_t.shape, lambda i: (0, 0)),
        pl.BlockSpec(Wmid.shape, lambda i: (0, 0, 0)),
        pl.BlockSpec(bmid.shape, lambda i: (0, 0, 0)),
        pl.BlockSpec(W5_bd.shape, lambda i: (0, 0)),
        pl.BlockSpec(b5_t.shape, lambda i: (0, 0)),
    ]
    out_specs = pl.BlockSpec((tbp, G * out_pad), lambda i: (i, 0))
    out_shape = jax.ShapeDtypeStruct((rows_pad, G * out_pad), jnp.float32)

    # Advisory cost estimate so XLA overlaps surrounding ops.
    gk, gn, go = G * feat_pad, G * w, G * out_pad
    flops = 2 * rows_pad * (gk * gn + n_mid * gn * gn + gn * go)
    weight_bytes = sum(int(a.size) * a.dtype.itemsize
                       for a in (W0_bd, b0_t, Wmid, bmid, W5_bd, b5_t))
    bytes_accessed = (weight_bytes
                      + int(x_packed.size) * x_packed.dtype.itemsize
                      + rows_pad * go * 4)
    cost = pl.CostEstimate(flops=flops,
                           transcendentals=(n_mid + 1) * rows_pad * gn,
                           bytes_accessed=bytes_accessed)

    out = pl.pallas_call(
        partial(mlp_kernel, compute_dtype=compute_dtype, n_mid=n_mid),
        out_shape=out_shape,
        grid=grid,
        in_specs=in_specs,
        out_specs=out_specs,
        compiler_params=pltpu.CompilerParams(
            dimension_semantics=("parallel",)),  # v7x: shard batch over 2 TCs
        cost_estimate=cost,
    )(x_packed, W0_bd, b0_t, Wmid, bmid, W5_bd, b5_t)

    # Un-pack lanes -> rows, drop batch/feature padding.
    return out.reshape(B_pad, out_pad)[:B, :total_out]


def mlp_reference(x, params, cond_dim):
    """Pure-JAX reference for correctness checks."""
    h = x
    for i, (W, b) in enumerate(params):
        h = h @ W + b
        if i < len(params) - 1:
            h = _selu(h)
    zeros = jnp.zeros((x.shape[0], cond_dim), x.dtype)
    return jnp.concatenate([h, zeros], axis=1)


if __name__ == "__main__":
    # dim=8, cond_dim=4, time_varying=True -> in_features = 13, hidden w=64,
    # out_dim defaults to dim=8, output = (B, out_dim + cond_dim) = (B, 12).
    dim, cond_dim, w, time_varying = 8, 4, 64, True
    out_dim = dim
    in_features = dim + cond_dim + (1 if time_varying else 0)

    key = jax.random.PRNGKey(0)
    key, kx, kxb = jax.random.split(key, 3)
    params = init_mlp_params(key, dim, cond_dim=cond_dim, out_dim=out_dim,
                             w=w, time_varying=time_varying)

    # 1) Small-batch case (B=2), full f32: exact-ish match vs reference
    #    (block-diag packing + zero padding is mathematically exact in f32).
    B = 2
    x = jax.random.normal(kx, (B, in_features), jnp.float32)
    out = jax.block_until_ready(
        mlp_forward(x, params, cond_dim, out_dim, use_bf16=False))
    ref = mlp_reference(x, params, cond_dim)
    assert out.shape == (B, out_dim + cond_dim), out.shape
    assert jnp.allclose(out, ref, atol=1e-5, rtol=1e-5), "f32 mismatch vs reference"

    # 2) Batched case exercising the grid (>=2 steps) + default bf16 operands
    #    with f32 accumulation (expect ~1e-2 relative error).
    Bb = 512
    xb = jax.random.normal(kxb, (Bb, in_features), jnp.float32)
    out_b = jax.block_until_ready(mlp_forward(xb, params, cond_dim, out_dim))
    ref_b = mlp_reference(xb, params, cond_dim)
    assert out_b.shape == (Bb, out_dim + cond_dim), out_b.shape
    assert jnp.allclose(out_b, ref_b, atol=5e-2, rtol=5e-2), "bf16 mismatch vs reference"

    print("KERNEL_OK")
</pallas_src>

<mosaic_0001>
module attributes {stable_mosaic.version = 11 : i64} {
  func.func @mlp_kernel(%arg0: i32, %arg1: memref<8x64xf32, #tpu.memory_space<vmem>>, %arg2: memref<64x256xf32, #tpu.memory_space<vmem>>, %arg3: memref<1x256xf32, #tpu.memory_space<vmem>>, %arg4: memref<4x256x256xf32, #tpu.memory_space<vmem>>, %arg5: memref<4x1x256xf32, #tpu.memory_space<vmem>>, %arg6: memref<256x128xf32, #tpu.memory_space<vmem>>, %arg7: memref<1x128xf32, #tpu.memory_space<vmem>>, %arg8: memref<8x128xf32, #tpu.memory_space<vmem>>) attributes {dimension_semantics = [#tpu.dimension_semantics<parallel>], iteration_bounds = array<i64: 1>, scalar_prefetch = 0 : i64, scratch_operands = 0 : i64, tpu.core_type = #tpu.core_type<tc>, window_params = [{transform_indices = @transform_0, window_bounds = array<i64: 8, 64>}, {pipeline_mode = #tpu.pipeline_mode<synchronous>, transform_indices = @transform_1, window_bounds = array<i64: 64, 256>}, {pipeline_mode = #tpu.pipeline_mode<synchronous>, transform_indices = @transform_2, window_bounds = array<i64: 1, 256>}, {pipeline_mode = #tpu.pipeline_mode<synchronous>, transform_indices = @transform_3, window_bounds = array<i64: 4, 256, 256>}, {pipeline_mode = #tpu.pipeline_mode<synchronous>, transform_indices = @transform_4, window_bounds = array<i64: 4, 1, 256>}, {pipeline_mode = #tpu.pipeline_mode<synchronous>, transform_indices = @transform_5, window_bounds = array<i64: 256, 128>}, {pipeline_mode = #tpu.pipeline_mode<synchronous>, transform_indices = @transform_6, window_bounds = array<i64: 1, 128>}, {transform_indices = @transform_7, window_bounds = array<i64: 8, 128>}]} {
    %c0 = arith.constant 0 : index
    %c0_0 = arith.constant 0 : index
    %0 = vector.load %arg1[%c0, %c0_0] : memref<8x64xf32, #tpu.memory_space<vmem>>, vector<8x64xf32>
    %c0_1 = arith.constant 0 : index
    %c0_2 = arith.constant 0 : index
    %1 = vector.load %arg2[%c0_1, %c0_2] : memref<64x256xf32, #tpu.memory_space<vmem>>, vector<64x256xf32>
    %c0_3 = arith.constant 0 : index
    %c0_4 = arith.constant 0 : index
    %2 = vector.load %arg3[%c0_3, %c0_4] : memref<1x256xf32, #tpu.memory_space<vmem>>, vector<1x256xf32>
    %cst = arith.constant dense<0.000000e+00> : vector<8x256xf32>
    %3 = tpu.matmul %0, %1, %cst {dimension_numbers = #tpu.dot_dimension_numbers<[1], [0], [0], [1], [0, 0, 1, 1], [], []>} : vector<8x64xf32>, vector<64x256xf32>, vector<8x256xf32> -> vector<8x256xf32>
    %4 = vector.broadcast %2 : vector<1x256xf32> to vector<8x256xf32>
    %5 = arith.addf %3, %4 : vector<8x256xf32>
    %cst_5 = arith.constant 0.000000e+00 : f32
    %6 = vector.broadcast %cst_5 : f32 to vector<8x256xf32>
    %7 = arith.cmpf ogt, %5, %6 : vector<8x256xf32>
    %8 = math.exp %5 : vector<8x256xf32>
    %cst_6 = arith.constant 1.000000e+00 : f32
    %9 = vector.broadcast %cst_6 : f32 to vector<8x256xf32>
    %10 = arith.subf %8, %9 : vector<8x256xf32>
    %cst_7 = arith.constant 1.67326319 : f32
    %11 = vector.broadcast %cst_7 : f32 to vector<8x256xf32>
    %12 = arith.mulf %11, %10 : vector<8x256xf32>
    %13 = arith.select %7, %5, %12 : vector<8x256xi1>, vector<8x256xf32>
    %cst_8 = arith.constant 1.05070102 : f32
    %14 = vector.broadcast %cst_8 : f32 to vector<8x256xf32>
    %15 = arith.mulf %14, %13 : vector<8x256xf32>
    %c0_9 = arith.constant 0 : index
    %c0_10 = arith.constant 0 : index
    %c0_11 = arith.constant 0 : index
    %16 = vector.load %arg4[%c0_9, %c0_10, %c0_11] : memref<4x256x256xf32, #tpu.memory_space<vmem>>, vector<1x256x256xf32>
    %17 = vector.shape_cast %16 : vector<1x256x256xf32> to vector<256x256xf32>
    %c0_12 = arith.constant 0 : index
    %c0_13 = arith.constant 0 : index
    %c0_14 = arith.constant 0 : index
    %18 = vector.load %arg5[%c0_12, %c0_13, %c0_14] : memref<4x1x256xf32, #tpu.memory_space<vmem>>, vector<1x1x256xf32>
    %19 = vector.shape_cast %18 : vector<1x1x256xf32> to vector<1x256xf32>
    %cst_15 = arith.constant dense<0.000000e+00> : vector<8x256xf32>
    %20 = tpu.matmul %15, %17, %cst_15 {dimension_numbers = #tpu.dot_dimension_numbers<[1], [0], [0], [1], [0, 0, 1, 1], [], []>} : vector<8x256xf32>, vector<256x256xf32>, vector<8x256xf32> -> vector<8x256xf32>
    %21 = vector.broadcast %19 : vector<1x256xf32> to vector<8x256xf32>
    %22 = arith.addf %20, %21 : vector<8x256xf32>
    %cst_16 = arith.constant 0.000000e+00 : f32
    %23 = vector.broadcast %cst_16 : f32 to vector<8x256xf32>
    %24 = arith.cmpf ogt, %22, %23 : vector<8x256xf32>
    %25 = math.exp %22 : vector<8x256xf32>
    %cst_17 = arith.constant 1.000000e+00 : f32
    %26 = vector.broadcast %cst_17 : f32 to vector<8x256xf32>
    %27 = arith.subf %25, %26 : vector<8x256xf32>
    %cst_18 = arith.constant 1.67326319 : f32
    %28 = vector.broadcast %cst_18 : f32 to vector<8x256xf32>
    %29 = arith.mulf %28, %27 : vector<8x256xf32>
    %30 = arith.select %24, %22, %29 : vector<8x256xi1>, vector<8x256xf32>
    %cst_19 = arith.constant 1.05070102 : f32
    %31 = vector.broadcast %cst_19 : f32 to vector<8x256xf32>
    %32 = arith.mulf %31, %30 : vector<8x256xf32>
    %c1 = arith.constant 1 : index
    %c0_20 = arith.constant 0 : index
    %c0_21 = arith.constant 0 : index
    %33 = vector.load %arg4[%c1, %c0_20, %c0_21] : memref<4x256x256xf32, #tpu.memory_space<vmem>>, vector<1x256x256xf32>
    %34 = vector.shape_cast %33 : vector<1x256x256xf32> to vector<256x256xf32>
    %c1_22 = arith.constant 1 : index
    %c0_23 = arith.constant 0 : index
    %c0_24 = arith.constant 0 : index
    %35 = vector.load %arg5[%c1_22, %c0_23, %c0_24] : memref<4x1x256xf32, #tpu.memory_space<vmem>>, vector<1x1x256xf32>
    %36 = vector.shape_cast %35 : vector<1x1x256xf32> to vector<1x256xf32>
    %cst_25 = arith.constant dense<0.000000e+00> : vector<8x256xf32>
    %37 = tpu.matmul %32, %34, %cst_25 {dimension_numbers = #tpu.dot_dimension_numbers<[1], [0], [0], [1], [0, 0, 1, 1], [], []>} : vector<8x256xf32>, vector<256x256xf32>, vector<8x256xf32> -> vector<8x256xf32>
    %38 = vector.broadcast %36 : vector<1x256xf32> to vector<8x256xf32>
    %39 = arith.addf %37, %38 : vector<8x256xf32>
    %cst_26 = arith.constant 0.000000e+00 : f32
    %40 = vector.broadcast %cst_26 : f32 to vector<8x256xf32>
    %41 = arith.cmpf ogt, %39, %40 : vector<8x256xf32>
    %42 = math.exp %39 : vector<8x256xf32>
    %cst_27 = arith.constant 1.000000e+00 : f32
    %43 = vector.broadcast %cst_27 : f32 to vector<8x256xf32>
    %44 = arith.subf %42, %43 : vector<8x256xf32>
    %cst_28 = arith.constant 1.67326319 : f32
    %45 = vector.broadcast %cst_28 : f32 to vector<8x256xf32>
    %46 = arith.mulf %45, %44 : vector<8x256xf32>
    %47 = arith.select %41, %39, %46 : vector<8x256xi1>, vector<8x256xf32>
    %cst_29 = arith.constant 1.05070102 : f32
    %48 = vector.broadcast %cst_29 : f32 to vector<8x256xf32>
    %49 = arith.mulf %48, %47 : vector<8x256xf32>
    %c2 = arith.constant 2 : index
    %c0_30 = arith.constant 0 : index
    %c0_31 = arith.constant 0 : index
    %50 = vector.load %arg4[%c2, %c0_30, %c0_31] : memref<4x256x256xf32, #tpu.memory_space<vmem>>, vector<1x256x256xf32>
    %51 = vector.shape_cast %50 : vector<1x256x256xf32> to vector<256x256xf32>
    %c2_32 = arith.constant 2 : index
    %c0_33 = arith.constant 0 : index
    %c0_34 = arith.constant 0 : index
    %52 = vector.load %arg5[%c2_32, %c0_33, %c0_34] : memref<4x1x256xf32, #tpu.memory_space<vmem>>, vector<1x1x256xf32>
    %53 = vector.shape_cast %52 : vector<1x1x256xf32> to vector<1x256xf32>
    %cst_35 = arith.constant dense<0.000000e+00> : vector<8x256xf32>
    %54 = tpu.matmul %49, %51, %cst_35 {dimension_numbers = #tpu.dot_dimension_numbers<[1], [0], [0], [1], [0, 0, 1, 1], [], []>} : vector<8x256xf32>, vector<256x256xf32>, vector<8x256xf32> -> vector<8x256xf32>
    %55 = vector.broadcast %53 : vector<1x256xf32> to vector<8x256xf32>
    %56 = arith.addf %54, %55 : vector<8x256xf32>
    %cst_36 = arith.constant 0.000000e+00 : f32
    %57 = vector.broadcast %cst_36 : f32 to vector<8x256xf32>
    %58 = arith.cmpf ogt, %56, %57 : vector<8x256xf32>
    %59 = math.exp %56 : vector<8x256xf32>
    %cst_37 = arith.constant 1.000000e+00 : f32
    %60 = vector.broadcast %cst_37 : f32 to vector<8x256xf32>
    %61 = arith.subf %59, %60 : vector<8x256xf32>
    %cst_38 = arith.constant 1.67326319 : f32
    %62 = vector.broadcast %cst_38 : f32 to vector<8x256xf32>
    %63 = arith.mulf %62, %61 : vector<8x256xf32>
    %64 = arith.select %58, %56, %63 : vector<8x256xi1>, vector<8x256xf32>
    %cst_39 = arith.constant 1.05070102 : f32
    %65 = vector.broadcast %cst_39 : f32 to vector<8x256xf32>
    %66 = arith.mulf %65, %64 : vector<8x256xf32>
    %c3 = arith.constant 3 : index
    %c0_40 = arith.constant 0 : index
    %c0_41 = arith.constant 0 : index
    %67 = vector.load %arg4[%c3, %c0_40, %c0_41] : memref<4x256x256xf32, #tpu.memory_space<vmem>>, vector<1x256x256xf32>
    %68 = vector.shape_cast %67 : vector<1x256x256xf32> to vector<256x256xf32>
    %c3_42 = arith.constant 3 : index
    %c0_43 = arith.constant 0 : index
    %c0_44 = arith.constant 0 : index
    %69 = vector.load %arg5[%c3_42, %c0_43, %c0_44] : memref<4x1x256xf32, #tpu.memory_space<vmem>>, vector<1x1x256xf32>
    %70 = vector.shape_cast %69 : vector<1x1x256xf32> to vector<1x256xf32>
    %cst_45 = arith.constant dense<0.000000e+00> : vector<8x256xf32>
    %71 = tpu.matmul %66, %68, %cst_45 {dimension_numbers = #tpu.dot_dimension_numbers<[1], [0], [0], [1], [0, 0, 1, 1], [], []>} : vector<8x256xf32>, vector<256x256xf32>, vector<8x256xf32> -> vector<8x256xf32>
    %72 = vector.broadcast %70 : vector<1x256xf32> to vector<8x256xf32>
    %73 = arith.addf %71, %72 : vector<8x256xf32>
    %cst_46 = arith.constant 0.000000e+00 : f32
    %74 = vector.broadcast %cst_46 : f32 to vector<8x256xf32>
    %75 = arith.cmpf ogt, %73, %74 : vector<8x256xf32>
    %76 = math.exp %73 : vector<8x256xf32>
    %cst_47 = arith.constant 1.000000e+00 : f32
    %77 = vector.broadcast %cst_47 : f32 to vector<8x256xf32>
    %78 = arith.subf %76, %77 : vector<8x256xf32>
    %cst_48 = arith.constant 1.67326319 : f32
    %79 = vector.broadcast %cst_48 : f32 to vector<8x256xf32>
    %80 = arith.mulf %79, %78 : vector<8x256xf32>
    %81 = arith.select %75, %73, %80 : vector<8x256xi1>, vector<8x256xf32>
    %cst_49 = arith.constant 1.05070102 : f32
    %82 = vector.broadcast %cst_49 : f32 to vector<8x256xf32>
    %83 = arith.mulf %82, %81 : vector<8x256xf32>
    %c0_50 = arith.constant 0 : index
    %c0_51 = arith.constant 0 : index
    %84 = vector.load %arg6[%c0_50, %c0_51] : memref<256x128xf32, #tpu.memory_space<vmem>>, vector<256x128xf32>
    %c0_52 = arith.constant 0 : index
    %c0_53 = arith.constant 0 : index
    %85 = vector.load %arg7[%c0_52, %c0_53] : memref<1x128xf32, #tpu.memory_space<vmem>>, vector<1x128xf32>
    %cst_54 = arith.constant dense<0.000000e+00> : vector<8x128xf32>
    %86 = tpu.matmul %83, %84, %cst_54 {dimension_numbers = #tpu.dot_dimension_numbers<[1], [0], [0], [1], [0, 0, 1, 1], [], []>} : vector<8x256xf32>, vector<256x128xf32>, vector<8x128xf32> -> vector<8x128xf32>
    %87 = vector.broadcast %85 : vector<1x128xf32> to vector<8x128xf32>
    %88 = arith.addf %86, %87 : vector<8x128xf32>
    %c0_55 = arith.constant 0 : index
    %c0_56 = arith.constant 0 : index
    %89 = vector.load %arg8[%c0_55, %c0_56] : memref<8x128xf32, #tpu.memory_space<vmem>>, vector<8x128xf32>
    tpu.vector_store %arg8[%c0_55, %c0_56], %88 {strides = array<i32>} : memref<8x128xf32, #tpu.memory_space<vmem>>, vector<8x128xf32>,
    return
  }
  func.func @transform_0(%arg0: i32) -> (i32, i32) {
    %c0_i32 = arith.constant 0 : i32
    %c0_i32_0 = arith.constant 0 : i32
    return %arg0, %c0_i32 : i32, i32
  }
  func.func @transform_1(%arg0: i32) -> (i32, i32) {
    %c0_i32 = arith.constant 0 : i32
    %c0_i32_0 = arith.constant 0 : i32
    %c0_i32_1 = arith.constant 0 : i32
    return %c0_i32, %c0_i32_0 : i32, i32
  }
  func.func @transform_2(%arg0: i32) -> (i32, i32) {
    %c0_i32 = arith.constant 0 : i32
    %c0_i32_0 = arith.constant 0 : i32
    %c0_i32_1 = arith.constant 0 : i32
    return %c0_i32, %c0_i32_0 : i32, i32
  }
  func.func @transform_3(%arg0: i32) -> (i32, i32, i32) {
    %c0_i32 = arith.constant 0 : i32
    %c0_i32_0 = arith.constant 0 : i32
    %c0_i32_1 = arith.constant 0 : i32
    %c0_i32_2 = arith.constant 0 : i32
    return %c0_i32, %c0_i32_0, %c0_i32_1 : i32, i32, i32
  }
  func.func @transform_4(%arg0: i32) -> (i32, i32, i32) {
    %c0_i32 = arith.constant 0 : i32
    %c0_i32_0 = arith.constant 0 : i32
    %c0_i32_1 = arith.constant 0 : i32
    %c0_i32_2 = arith.constant 0 : i32
    return %c0_i32, %c0_i32_0, %c0_i32_1 : i32, i32, i32
  }
  func.func @transform_5(%arg0: i32) -> (i32, i32) {
    %c0_i32 = arith.constant 0 : i32
    %c0_i32_0 = arith.constant 0 : i32
    %c0_i32_1 = arith.constant 0 : i32
    return %c0_i32, %c0_i32_0 : i32, i32
  }
  func.func @transform_6(%arg0: i32) -> (i32, i32) {
    %c0_i32 = arith.constant 0 : i32
    %c0_i32_0 = arith.constant 0 : i32
    %c0_i32_1 = arith.constant 0 : i32
    return %c0_i32, %c0_i32_0 : i32, i32
  }
  func.func @transform_7(%arg0: i32) -> (i32, i32) {
    %c0_i32 = arith.constant 0 : i32
    %c0_i32_0 = arith.constant 0 : i32
    return %arg0, %c0_i32 : i32, i32
  }
}

</mosaic_0001>

<llo_original>
// kernel: tpu_custom_call.1
$region0: #{tpu_custom_call.1}
  #allocation0 [shape = 'u32[]', space=smem, size = 0x4, offset = 0x4, fixed_abs, tag = 'smem constant byte address 0x4 - core index']
  #allocation1 [shape = 'u32[144,128]{1,0:T(1,128)}', space=vmem, size = 0x12000, scoped, tag = 'internal scratch']
  %s0 = inlined_call_operand.hbm [shape: f32[8,64], index: 0, kind: input, shape index: {}]
  %s1 = inlined_call_operand.hbm [shape: f32[64,256], index: 1, kind: input, shape index: {}]
  %s2 = inlined_call_operand.vmem [shape: f32[1,256], index: 2, kind: input, shape index: {}]
  %s3 = inlined_call_operand.hbm [shape: f32[4,256,256], index: 3, kind: input, shape index: {}]
  %s4 = inlined_call_operand.vmem [shape: f32[4,1,256], index: 4, kind: input, shape index: {}]
  %s5 = inlined_call_operand.hbm [shape: f32[256,128], index: 5, kind: input, shape index: {}]
  %s6 = inlined_call_operand.vmem [shape: f32[1,128], index: 6, kind: input, shape index: {}]
  %s7 = inlined_call_operand.hbm [shape: f32[8,128], index: 7, kind: output, shape index: {}]
  %s8 = sld [smem:[#allocation0]]
  $region54: #{tpu_custom_call.1} parent=0
    _
  %s10 = ssub.s32 1, %s8
  %s11 = scalar_select 0, %s10, %s8
  $region1: #{tpu_custom_call.1} parent=0
    #allocation2 [shape = 'u8[4096]{0}', space=vmem, size = 0x1000, scoped, tag = 'input window, operand 0, single buffered']
    #allocation3 [shape = 's32[1]{0}', space=sflag, size = 0x4, scoped, tag = 'scoped memory for tpu_custom_call.1']
    #allocation4 [shape = 's32[1]{0}', space=sflag, size = 0x4, scoped, tag = 'scoped memory for tpu_custom_call.1']
    #allocation5 [shape = 'u8[65536]{0}', space=vmem, size = 0x10000, scoped, tag = 'input window, operand 1, single buffered']
    #allocation6 [shape = 's32[1]{0}', space=sflag, size = 0x4, scoped, tag = 'scoped memory for tpu_custom_call.1']
    #allocation7 [shape = 'u8[1048576]{0}', space=vmem, size = 0x100000, scoped, tag = 'input window, operand 3, single buffered']
    #allocation8 [shape = 'u8[131072]{0}', space=vmem, size = 0x20000, scoped, tag = 'input window, operand 5, single buffered']
    #allocation9 [shape = 's32[1]{0}', space=sflag, size = 0x4, scoped, tag = 'scoped memory for tpu_custom_call.1']
    #allocation10 [shape = 'u8[4096]{0}', space=vmem, size = 0x1000, scoped, tag = 'output window, operand 0, single buffered']
    %12 = vsyncpa [#allocation3], 0
    %13 = vsyncpa [#allocation6], 0
    %14 = vsyncpa [#allocation9], 0
    %15 = vsyncpa [#allocation4], 0
    // Predicated region
    $region2: #{tpu_custom_call.1} parent=1 // pred_check
      _
    $region3: #{tpu_custom_call.1} parent=1 // pred_check_branch
      %17 = sbr.rel (0) target = $region5
    $region4: #{tpu_custom_call.1} parent=1 // pred_region
      %s19 = ssub.s32 128, 128
      %20 = vsyncadd [#allocation3], %s19
      %s22 = sshll.u32 [#allocation2], 4
      %s23 = int_to_ptr.vmem [resolvable:$true] %s22
      %25 = dma.hbm_to_vmem [thread:$0]  %s0, 128, %s23, [#allocation3]
    $region5: #{tpu_custom_call.1} parent=1 // pred_fallthru
      _
    // Predicated region
    $region6: #{tpu_custom_call.1} parent=1 // pred_check
      _
    $region7: #{tpu_custom_call.1} parent=1 // pred_check_branch
      %27 = sbr.rel (0) target = $region9
    $region8: #{tpu_custom_call.1} parent=1 // pred_region
      %s29 = ssub.s32 2048, 2048
      %30 = vsyncadd [#allocation6], %s29
      %s31 = sshll.u32 [#allocation5], 4
      %s32 = int_to_ptr.vmem [resolvable:$true] %s31
      %37 = dma.hbm_to_vmem [thread:$0]  %s1, 2048, %s32, [#allocation6], 256, 256, 16
    $region9: #{tpu_custom_call.1} parent=1 // pred_fallthru
      _
    // Predicated region
    $region10: #{tpu_custom_call.1} parent=1 // pred_check
      _
    $region11: #{tpu_custom_call.1} parent=1 // pred_check_branch
      %39 = sbr.rel (0) target = $region13
    $region12: #{tpu_custom_call.1} parent=1 // pred_region
      _
    $region13: #{tpu_custom_call.1} parent=1 // pred_fallthru
      _
    // Predicated region
    $region14: #{tpu_custom_call.1} parent=1 // pred_check
      _
    $region15: #{tpu_custom_call.1} parent=1 // pred_check_branch
      %41 = sbr.rel (0) target = $region17
    $region16: #{tpu_custom_call.1} parent=1 // pred_region
      %s43 = ssub.s32 32768, 32768
      %44 = vsyncadd [#allocation6], %s43
      %s45 = sshll.u32 [#allocation7], 4
      %s46 = int_to_ptr.vmem [resolvable:$true] %s45
      %51 = dma.hbm_to_vmem [thread:$0]  %s3, 32768, %s46, [#allocation6], 256, 256, 16
    $region17: #{tpu_custom_call.1} parent=1 // pred_fallthru
      _
    // Predicated region
    $region18: #{tpu_custom_call.1} parent=1 // pred_check
      _
    $region19: #{tpu_custom_call.1} parent=1 // pred_check_branch
      %53 = sbr.rel (0) target = $region21
    $region20: #{tpu_custom_call.1} parent=1 // pred_region
      _
    $region21: #{tpu_custom_call.1} parent=1 // pred_fallthru
      _
    // Predicated region
    $region22: #{tpu_custom_call.1} parent=1 // pred_check
      _
    $region23: #{tpu_custom_call.1} parent=1 // pred_check_branch
      %55 = sbr.rel (0) target = $region25
    $region24: #{tpu_custom_call.1} parent=1 // pred_region
      %s57 = ssub.s32 4096, 4096
      %58 = vsyncadd [#allocation9], %s57
      %s59 = sshll.u32 [#allocation8], 4
      %s60 = int_to_ptr.vmem [resolvable:$true] %s59
      %65 = dma.hbm_to_vmem [thread:$0]  %s5, 4096, %s60, [#allocation9], 128, 128, 8
    $region25: #{tpu_custom_call.1} parent=1 // pred_fallthru
      _
    // Predicated region
    $region26: #{tpu_custom_call.1} parent=1 // pred_check
      _
    $region27: #{tpu_custom_call.1} parent=1 // pred_check_branch
      %67 = sbr.rel (0) target = $region29
    $region28: #{tpu_custom_call.1} parent=1 // pred_region
      _
    $region29: #{tpu_custom_call.1} parent=1 // pred_fallthru
      _
    // Predicated region
    $region30: #{tpu_custom_call.1} parent=1 // pred_check
      _
    $region31: #{tpu_custom_call.1} parent=1 // pred_check_branch
      %69 = sbr.rel (0) target = $region33
    $region32: #{tpu_custom_call.1} parent=1 // pred_region
      %70 = dma.done [#allocation3], 128
    $region33: #{tpu_custom_call.1} parent=1 // pred_fallthru
      _
    // Predicated region
    $region34: #{tpu_custom_call.1} parent=1 // pred_check
      _
    $region35: #{tpu_custom_call.1} parent=1 // pred_check_branch
      %72 = sbr.rel (0) target = $region37
    $region36: #{tpu_custom_call.1} parent=1 // pred_region
      %73 = dma.done [#allocation6], 2048
    $region37: #{tpu_custom_call.1} parent=1 // pred_fallthru
      _
    // Predicated region
    $region38: #{tpu_custom_call.1} parent=1 // pred_check
      _
    $region39: #{tpu_custom_call.1} parent=1 // pred_check_branch
      %75 = sbr.rel (0) target = $region41
    $region40: #{tpu_custom_call.1} parent=1 // pred_region
      %76 = dma.done [#allocation6], 32768
    $region41: #{tpu_custom_call.1} parent=1 // pred_fallthru
      _
    // Predicated region
    $region42: #{tpu_custom_call.1} parent=1 // pred_check
      _
    $region43: #{tpu_custom_call.1} parent=1 // pred_check_branch
      %78 = sbr.rel (0) target = $region45
    $region44: #{tpu_custom_call.1} parent=1 // pred_region
      %79 = dma.done [#allocation9], 4096
    $region45: #{tpu_custom_call.1} parent=1 // pred_fallthru
      _
    %v80 = vld [vmem:[#allocation2] sm:$0xff]
    %v81 = vld [vmem:[#allocation5] sm:$0xff]
    %v82 = vld [vmem:[#allocation5 + $0x8] sm:$0xff]
    %v83 = vld [vmem:[#allocation5 + $0x10] sm:$0xff]
    %v84 = vld [vmem:[#allocation5 + $0x18] sm:$0xff]
    %v85 = vld [vmem:[#allocation5 + $0x20] sm:$0xff]
    %v86 = vld [vmem:[#allocation5 + $0x28] sm:$0xff]
    %v87 = vld [vmem:[#allocation5 + $0x30] sm:$0xff]
    %v88 = vld [vmem:[#allocation5 + $0x38] sm:$0xff]
    %v89 = vld [vmem:[#allocation5 + $0x40] sm:$0xff]
    %v90 = vld [vmem:[#allocation5 + $0x48] sm:$0xff]
    %v91 = vld [vmem:[#allocation5 + $0x50] sm:$0xff]
    %v92 = vld [vmem:[#allocation5 + $0x58] sm:$0xff]
    %v93 = vld [vmem:[#allocation5 + $0x60] sm:$0xff]
    %v94 = vld [vmem:[#allocation5 + $0x68] sm:$0xff]
    %v95 = vld [vmem:[#allocation5 + $0x70] sm:$0xff]
    %v96 = vld [vmem:[#allocation5 + $0x78] sm:$0xff]
    %v97 = vld [vmem:[%s2] sm:$0x3]
    %v99 = vlaneseq
    %v100 = vshrl.u32 %v99, 7
    %v101 = vsub.s32 0, %v100
    %v102 = vrot.slane %v97, %v101
    %v103 = vlaneseq
    %v104 = vshrl.u32 %v103, 7
    %v105 = vsub.s32 1, %v104
    %v106 = vrot.slane %v97, %v105
    %vm109 = vcmask 523264
    %v111 = vsel %vm109, %v80, 0
    %113 = vmatprep.subr.mxu0 %v82
    %114 = vmatpush1.msra.mxu0 %v81
    %115 = vmatprep.subr.mxu0 %v84
    %116 = vmatpush1.msra.mxu0 %v83
    %117 = vmatprep.subr.mxu0 %v86
    %118 = vmatpush1.msra.mxu0 %v85
    %119 = vmatprep.subr.mxu0 %v88
    %120 = vmatpush1.msra.mxu0 %v87
    %121 = vmatprep.subr.mxu0 %v90
    %122 = vmatpush1.msra.mxu0 %v89
    %123 = vmatprep.subr.mxu0 %v92
    %124 = vmatpush1.msra.mxu0 %v91
    %125 = vmatprep.subr.mxu0 %v94
    %126 = vmatpush1.msra.mxu0 %v93
    %127 = vmatprep.subr.mxu0 %v96
    %128 = vmatpush1.msra.mxu0 %v95
    %129 = vmatprep.subr.mxu0 0.0
    %130 = vmatpush1.msra.mxu0 0.0
    %131 = vmatprep.subr.mxu0 0.0
    %132 = vmatpush1.msra.mxu0 0.0
    %133 = vmatprep.subr.mxu0 0.0
    %134 = vmatpush1.msra.mxu0 0.0
    %135 = vmatprep.subr.mxu0 0.0
    %136 = vmatpush1.msra.mxu0 0.0
    %137 = vmatprep.subr.mxu0 0.0
    %138 = vmatpush1.msra.mxu0 0.0
    %139 = vmatprep.subr.mxu0 0.0
    %140 = vmatpush1.msra.mxu0 0.0
    %141 = vmatprep.subr.mxu0 0.0
    %142 = vmatpush1.msra.mxu0 0.0
    %143 = vmatprep.subr.mxu0 0.0
    %144 = vmatpush1.msra.mxu0 0.0
    %145 = vmatprep.subr.mxu0 0.0
    %146 = vmatpush1.msra.mxu0 0.0
    %147 = vmatprep.subr.mxu0 0.0
    %148 = vmatpush1.msra.mxu0 0.0
    %149 = vmatprep.subr.mxu0 0.0
    %150 = vmatpush1.msra.mxu0 0.0
    %151 = vmatprep.subr.mxu0 0.0
    %152 = vmatpush1.msra.mxu0 0.0
    %153 = vmatprep.subr.mxu0 0.0
    %154 = vmatpush1.msra.mxu0 0.0
    %155 = vmatprep.subr.mxu0 0.0
    %156 = vmatpush1.msra.mxu0 0.0
    %157 = vmatprep.subr.mxu0 0.0
    %158 = vmatpush1.msra.mxu0 0.0
    %159 = vmatprep.subr.mxu0 0.0
    %160 = vmatpush1.msra.mxu0 0.0
    %161 = vmatprep.subr.mxu0 0.0
    %162 = vmatpush1.msra.mxu0 0.0
    %163 = vmatprep.subr.mxu0 0.0
    %164 = vmatpush1.msra.mxu0 0.0
    %165 = vmatprep.subr.mxu0 0.0
    %166 = vmatpush1.msra.mxu0 0.0
    %167 = vmatprep.subr.mxu0 0.0
    %168 = vmatpush1.msra.mxu0 0.0
    %169 = vmatprep.subr.mxu0 0.0
    %170 = vmatpush1.msra.mxu0 0.0
    %171 = vmatprep.subr.mxu0 0.0
    %172 = vmatpush1.msra.mxu0 0.0
    %173 = vmatprep.subr.mxu0 0.0
    %174 = vmatpush1.msra.mxu0 0.0
    %175 = vmatprep.subr.mxu0 0.0
    %176 = vmatpush1.msra.mxu0 0.0
    %177 = vmatprep.mubr.f32.mxu0 0.0
    %178 = vmatmul.mubr.f32.gmra.mrb[0].mxu0 %v111
    %v179 = vpop.f32.mrb[0].mxu0
    %v180 = vadd.f32 %v102, %v179
    %v181 = vpop.f32.mrb[0].mxu0
    %v182 = vadd.f32 %v106, %v181
    %183 = vdwg.mxu0
    %vm184 = vcmp.gt.f32.partialorder %v180, 0.0
    %vm185 = vcmp.gt.f32.partialorder %v182, 0.0
    %v186 = vmul.f32 %v180, 1.442695
    %v187 = vpow.pop %v186
    %v188 = vmul.f32 %v182, 1.442695
    %v189 = vpow.pop %v188
    %v190 = vsub.f32 %v187, 1.0
    %v191 = vsub.f32 %v189, 1.0
    %v192 = vmul.f32 %v190, 1.6732632
    %v193 = vmul.f32 %v191, 1.6732632
    %v194 = vsel %vm184, %v180, %v192
    %v195 = vsel %vm185, %v182, %v193
    %v196 = vmul.f32 %v194, 1.050701
    %v197 = vmul.f32 %v195, 1.050701
    %v198 = vld [vmem:[#allocation7] sm:$0xff]
    %v199 = vld [vmem:[#allocation7 + $0x8] sm:$0xff]
    %v200 = vld [vmem:[#allocation7 + $0x10] sm:$0xff]
    %v201 = vld [vmem:[#allocation7 + $0x18] sm:$0xff]
    %v202 = vld [vmem:[#allocation7 + $0x20] sm:$0xff]
    %v203 = vld [vmem:[#allocation7 + $0x28] sm:$0xff]
    %v204 = vld [vmem:[#allocation7 + $0x30] sm:$0xff]
    %v205 = vld [vmem:[#allocation7 + $0x38] sm:$0xff]
    %v206 = vld [vmem:[#allocation7 + $0x40] sm:$0xff]
    %v207 = vld [vmem:[#allocation7 + $0x48] sm:$0xff]
    %v208 = vld [vmem:[#allocation7 + $0x50] sm:$0xff]
    %v209 = vld [vmem:[#allocation7 + $0x58] sm:$0xff]
    %v210 = vld [vmem:[#allocation7 + $0x60] sm:$0xff]
    %v211 = vld [vmem:[#allocation7 + $0x68] sm:$0xff]
    %v212 = vld [vmem:[#allocation7 + $0x70] sm:$0xff]
    %v213 = vld [vmem:[#allocation7 + $0x78] sm:$0xff]
    %v214 = vld [vmem:[#allocation7 + $0x80] sm:$0xff]
    %v215 = vld [vmem:[#allocation7 + $0x88] sm:$0xff]
    %v216 = vld [vmem:[#allocation7 + $0x90] sm:$0xff]
    %v217 = vld [vmem:[#allocation7 + $0x98] sm:$0xff]
    %v218 = vld [vmem:[#allocation7 + $0xa0] sm:$0xff]
    %v219 = vld [vmem:[#allocation7 + $0xa8] sm:$0xff]
    %v220 = vld [vmem:[#allocation7 + $0xb0] sm:$0xff]
    %v221 = vld [vmem:[#allocation7 + $0xb8] sm:$0xff]
    %v222 = vld [vmem:[#allocation7 + $0xc0] sm:$0xff]
    %v223 = vld [vmem:[#allocation7 + $0xc8] sm:$0xff]
    %v224 = vld [vmem:[#allocation7 + $0xd0] sm:$0xff]
    %v225 = vld [vmem:[#allocation7 + $0xd8] sm:$0xff]
    %v226 = vld [vmem:[#allocation7 + $0xe0] sm:$0xff]
    %v227 = vld [vmem:[#allocation7 + $0xe8] sm:$0xff]
    %v228 = vld [vmem:[#allocation7 + $0xf0] sm:$0xff]
    %v229 = vld [vmem:[#allocation7 + $0xf8] sm:$0xff]
    %v230 = vld [vmem:[#allocation7 + $0x100] sm:$0xff]
    %v231 = vld [vmem:[#allocation7 + $0x108] sm:$0xff]
    %v232 = vld [vmem:[#allocation7 + $0x110] sm:$0xff]
    %v233 = vld [vmem:[#allocation7 + $0x118] sm:$0xff]
    %v234 = vld [vmem:[#allocation7 + $0x120] sm:$0xff]
    %v235 = vld [vmem:[#allocation7 + $0x128] sm:$0xff]
    %v236 = vld [vmem:[#allocation7 + $0x130] sm:$0xff]
    %v237 = vld [vmem:[#allocation7 + $0x138] sm:$0xff]
    %v238 = vld [vmem:[#allocation7 + $0x140] sm:$0xff]
    %v239 = vld [vmem:[#allocation7 + $0x148] sm:$0xff]
    %v240 = vld [vmem:[#allocation7 + $0x150] sm:$0xff]
    %v241 = vld [vmem:[#allocation7 + $0x158] sm:$0xff]
    %v242 = vld [vmem:[#allocation7 + $0x160] sm:$0xff]
    %v243 = vld [vmem:[#allocation7 + $0x168] sm:$0xff]
    %v244 = vld [vmem:[#allocation7 + $0x170] sm:$0xff]
    %v245 = vld [vmem:[#allocation7 + $0x178] sm:$0xff]
    %v246 = vld [vmem:[#allocation7 + $0x180] sm:$0xff]
    %v247 = vld [vmem:[#allocation7 + $0x188] sm:$0xff]
    %v248 = vld [vmem:[#allocation7 + $0x190] sm:$0xff]
    %v249 = vld [vmem:[#allocation7 + $0x198] sm:$0xff]
    %v250 = vld [vmem:[#allocation7 + $0x1a0] sm:$0xff]
    %v251 = vld [vmem:[#allocation7 + $0x1a8] sm:$0xff]
    %v252 = vld [vmem:[#allocation7 + $0x1b0] sm:$0xff]
    %v253 = vld [vmem:[#allocation7 + $0x1b8] sm:$0xff]
    %v254 = vld [vmem:[#allocation7 + $0x1c0] sm:$0xff]
    %v255 = vld [vmem:[#allocation7 + $0x1c8] sm:$0xff]
    %v256 = vld [vmem:[#allocation7 + $0x1d0] sm:$0xff]
    %v257 = vld [vmem:[#allocation7 + $0x1d8] sm:$0xff]
    %v258 = vld [vmem:[#allocation7 + $0x1e0] sm:$0xff]
    %v259 = vld [vmem:[#allocation7 + $0x1e8] sm:$0xff]
    %v260 = vld [vmem:[#allocation7 + $0x1f0] sm:$0xff]
    %v261 = vld [vmem:[#allocation7 + $0x1f8] sm:$0xff]
    %v262 = vld [vmem:[%s4] sm:$0x3]
    %v264 = vlaneseq
    %v265 = vshrl.u32 %v264, 7
    %v266 = vsub.s32 0, %v265
    %v267 = vrot.slane %v262, %v266
    %v268 = vlaneseq
    %v269 = vshrl.u32 %v268, 7
    %v270 = vsub.s32 1, %v269
    %v271 = vrot.slane %v262, %v270
    %274 = vmatprep.subr.mxu0 %v199
    %275 = vmatpush1.msra.mxu0 %v198
    %276 = vmatprep.subr.mxu0 %v201
    %277 = vmatpush1.msra.mxu0 %v200
    %278 = vmatprep.subr.mxu0 %v203
    %279 = vmatpush1.msra.mxu0 %v202
    %280 = vmatprep.subr.mxu0 %v205
    %281 = vmatpush1.msra.mxu0 %v204
    %282 = vmatprep.subr.mxu0 %v207
    %283 = vmatpush1.msra.mxu0 %v206
    %284 = vmatprep.subr.mxu0 %v209
    %285 = vmatpush1.msra.mxu0 %v208
    %286 = vmatprep.subr.mxu0 %v211
    %287 = vmatpush1.msra.mxu0 %v210
    %288 = vmatprep.subr.mxu0 %v213
    %289 = vmatpush1.msra.mxu0 %v212
    %290 = vmatprep.subr.mxu0 %v215
    %291 = vmatpush1.msra.mxu0 %v214
    %292 = vmatprep.subr.mxu0 %v217
    %293 = vmatpush1.msra.mxu0 %v216
    %294 = vmatprep.subr.mxu0 %v219
    %295 = vmatpush1.msra.mxu0 %v218
    %296 = vmatprep.subr.mxu0 %v221
    %297 = vmatpush1.msra.mxu0 %v220
    %298 = vmatprep.subr.mxu0 %v223
    %299 = vmatpush1.msra.mxu0 %v222
    %300 = vmatprep.subr.mxu0 %v225
    %301 = vmatpush1.msra.mxu0 %v224
    %302 = vmatprep.subr.mxu0 %v227
    %303 = vmatpush1.msra.mxu0 %v226
    %304 = vmatprep.subr.mxu0 %v229
    %305 = vmatpush1.msra.mxu0 %v228
    %306 = vmatprep.subr.mxu0 %v231
    %307 = vmatpush1.msra.mxu0 %v230
    %308 = vmatprep.subr.mxu0 %v233
    %309 = vmatpush1.msra.mxu0 %v232
    %310 = vmatprep.subr.mxu0 %v235
    %311 = vmatpush1.msra.mxu0 %v234
    %312 = vmatprep.subr.mxu0 %v237
    %313 = vmatpush1.msra.mxu0 %v236
    %314 = vmatprep.subr.mxu0 %v239
    %315 = vmatpush1.msra.mxu0 %v238
    %316 = vmatprep.subr.mxu0 %v241
    %317 = vmatpush1.msra.mxu0 %v240
    %318 = vmatprep.subr.mxu0 %v243
    %319 = vmatpush1.msra.mxu0 %v242
    %320 = vmatprep.subr.mxu0 %v245
    %321 = vmatpush1.msra.mxu0 %v244
    %322 = vmatprep.subr.mxu0 %v247
    %323 = vmatpush1.msra.mxu0 %v246
    %324 = vmatprep.subr.mxu0 %v249
    %325 = vmatpush1.msra.mxu0 %v248
    %326 = vmatprep.subr.mxu0 %v251
    %327 = vmatpush1.msra.mxu0 %v250
    %328 = vmatprep.subr.mxu0 %v253
    %329 = vmatpush1.msra.mxu0 %v252
    %330 = vmatprep.subr.mxu0 %v255
    %331 = vmatpush1.msra.mxu0 %v254
    %332 = vmatprep.subr.mxu0 %v257
    %333 = vmatpush1.msra.mxu0 %v256
    %334 = vmatprep.subr.mxu0 %v259
    %335 = vmatpush1.msra.mxu0 %v258
    %336 = vmatprep.subr.mxu0 %v261
    %337 = vmatpush1.msra.mxu0 %v260
    %338 = vmatprep.mubr.f32.mxu0 %v197
    %339 = vmatmul.mubr.f32.gmra.mrb[0].mxu0 %v196
    %v340 = vpop.f32.mrb[0].mxu0
    %v341 = vadd.f32 %v267, %v340
    %v342 = vpop.f32.mrb[0].mxu0
    %v343 = vadd.f32 %v271, %v342
    %344 = vdwg.mxu0
    %vm345 = vcmp.gt.f32.partialorder %v341, 0.0
    %vm346 = vcmp.gt.f32.partialorder %v343, 0.0
    %v347 = vmul.f32 %v341, 1.442695
    %v348 = vpow.pop %v347
    %v349 = vmul.f32 %v343, 1.442695
    %v350 = vpow.pop %v349
    %v351 = vsub.f32 %v348, 1.0
    %v352 = vsub.f32 %v350, 1.0
    %v353 = vmul.f32 %v351, 1.6732632
    %v354 = vmul.f32 %v352, 1.6732632
    %v355 = vsel %vm345, %v341, %v353
    %v356 = vsel %vm346, %v343, %v354
    %v357 = vmul.f32 %v355, 1.050701
    %v358 = vmul.f32 %v356, 1.050701
    %s359 = scalar_lea.vmem [#allocation7], 512
    %v360 = vld [vmem:[%s359] sm:$0xff]
    %v361 = vld [vmem:[%s359 + $0x8] sm:$0xff]
    %v362 = vld [vmem:[%s359 + $0x10] sm:$0xff]
    %v363 = vld [vmem:[%s359 + $0x18] sm:$0xff]
    %v364 = vld [vmem:[%s359 + $0x20] sm:$0xff]
    %v365 = vld [vmem:[%s359 + $0x28] sm:$0xff]
    %v366 = vld [vmem:[%s359 + $0x30] sm:$0xff]
    %v367 = vld [vmem:[%s359 + $0x38] sm:$0xff]
    %v368 = vld [vmem:[%s359 + $0x40] sm:$0xff]
    %v369 = vld [vmem:[%s359 + $0x48] sm:$0xff]
    %v370 = vld [vmem:[%s359 + $0x50] sm:$0xff]
    %v371 = vld [vmem:[%s359 + $0x58] sm:$0xff]
    %v372 = vld [vmem:[%s359 + $0x60] sm:$0xff]
    %v373 = vld [vmem:[%s359 + $0x68] sm:$0xff]
    %v374 = vld [vmem:[%s359 + $0x70] sm:$0xff]
    %v375 = vld [vmem:[%s359 + $0x78] sm:$0xff]
    %v376 = vld [vmem:[%s359 + $0x80] sm:$0xff]
    %v377 = vld [vmem:[%s359 + $0x88] sm:$0xff]
    %v378 = vld [vmem:[%s359 + $0x90] sm:$0xff]
    %v379 = vld [vmem:[%s359 + $0x98] sm:$0xff]
    %v380 = vld [vmem:[%s359 + $0xa0] sm:$0xff]
    %v381 = vld [vmem:[%s359 + $0xa8] sm:$0xff]
    %v382 = vld [vmem:[%s359 + $0xb0] sm:$0xff]
    %v383 = vld [vmem:[%s359 + $0xb8] sm:$0xff]
    %v384 = vld [vmem:[%s359 + $0xc0] sm:$0xff]
    %v385 = vld [vmem:[%s359 + $0xc8] sm:$0xff]
    %v386 = vld [vmem:[%s359 + $0xd0] sm:$0xff]
    %v387 = vld [vmem:[%s359 + $0xd8] sm:$0xff]
    %v388 = vld [vmem:[%s359 + $0xe0] sm:$0xff]
    %v389 = vld [vmem:[%s359 + $0xe8] sm:$0xff]
    %v390 = vld [vmem:[%s359 + $0xf0] sm:$0xff]
    %v391 = vld [vmem:[%s359 + $0xf8] sm:$0xff]
    %v392 = vld [vmem:[%s359 + $0x100] sm:$0xff]
    %v393 = vld [vmem:[%s359 + $0x108] sm:$0xff]
    %v394 = vld [vmem:[%s359 + $0x110] sm:$0xff]
    %v395 = vld [vmem:[%s359 + $0x118] sm:$0xff]
    %v396 = vld [vmem:[%s359 + $0x120] sm:$0xff]
    %v397 = vld [vmem:[%s359 + $0x128] sm:$0xff]
    %v398 = vld [vmem:[%s359 + $0x130] sm:$0xff]
    %v399 = vld [vmem:[%s359 + $0x138] sm:$0xff]
    %v400 = vld [vmem:[%s359 + $0x140] sm:$0xff]
    %v401 = vld [vmem:[%s359 + $0x148] sm:$0xff]
    %v402 = vld [vmem:[%s359 + $0x150] sm:$0xff]
    %v403 = vld [vmem:[%s359 + $0x158] sm:$0xff]
    %v404 = vld [vmem:[%s359 + $0x160] sm:$0xff]
    %v405 = vld [vmem:[%s359 + $0x168] sm:$0xff]
    %v406 = vld [vmem:[%s359 + $0x170] sm:$0xff]
    %v407 = vld [vmem:[%s359 + $0x178] sm:$0xff]
    %v408 = vld [vmem:[%s359 + $0x180] sm:$0xff]
    %v409 = vld [vmem:[%s359 + $0x188] sm:$0xff]
    %v410 = vld [vmem:[%s359 + $0x190] sm:$0xff]
    %v411 = vld [vmem:[%s359 + $0x198] sm:$0xff]
    %v412 = vld [vmem:[%s359 + $0x1a0] sm:$0xff]
    %v413 = vld [vmem:[%s359 + $0x1a8] sm:$0xff]
    %v414 = vld [vmem:[%s359 + $0x1b0] sm:$0xff]
    %v415 = vld [vmem:[%s359 + $0x1b8] sm:$0xff]
    %v416 = vld [vmem:[%s359 + $0x1c0] sm:$0xff]
    %v417 = vld [vmem:[%s359 + $0x1c8] sm:$0xff]
    %v418 = vld [vmem:[%s359 + $0x1d0] sm:$0xff]
    %v419 = vld [vmem:[%s359 + $0x1d8] sm:$0xff]
    %v420 = vld [vmem:[%s359 + $0x1e0] sm:$0xff]
    %v421 = vld [vmem:[%s359 + $0x1e8] sm:$0xff]
    %v422 = vld [vmem:[%s359 + $0x1f0] sm:$0xff]
    %v423 = vld [vmem:[%s359 + $0x1f8] sm:$0xff]
    %s424 = scalar_lea.vmem %s4, 2
    %v425 = vld [vmem:[%s424] sm:$0x3]
    %v427 = vlaneseq
    %v428 = vshrl.u32 %v427, 7
    %v429 = vsub.s32 0, %v428
    %v430 = vrot.slane %v425, %v429
    %v431 = vlaneseq
    %v432 = vshrl.u32 %v431, 7
    %v433 = vsub.s32 1, %v432
    %v434 = vrot.slane %v425, %v433
    %437 = vmatprep.subr.mxu0 %v361
    %438 = vmatpush1.msra.mxu0 %v360
    %439 = vmatprep.subr.mxu0 %v363
    %440 = vmatpush1.msra.mxu0 %v362
    %441 = vmatprep.subr.mxu0 %v365
    %442 = vmatpush1.msra.mxu0 %v364
    %443 = vmatprep.subr.mxu0 %v367
    %444 = vmatpush1.msra.mxu0 %v366
    %445 = vmatprep.subr.mxu0 %v369
    %446 = vmatpush1.msra.mxu0 %v368
    %447 = vmatprep.subr.mxu0 %v371
    %448 = vmatpush1.msra.mxu0 %v370
    %449 = vmatprep.subr.mxu0 %v373
    %450 = vmatpush1.msra.mxu0 %v372
    %451 = vmatprep.subr.mxu0 %v375
    %452 = vmatpush1.msra.mxu0 %v374
    %453 = vmatprep.subr.mxu0 %v377
    %454 = vmatpush1.msra.mxu0 %v376
    %455 = vmatprep.subr.mxu0 %v379
    %456 = vmatpush1.msra.mxu0 %v378
    %457 = vmatprep.subr.mxu0 %v381
    %458 = vmatpush1.msra.mxu0 %v380
    %459 = vmatprep.subr.mxu0 %v383
    %460 = vmatpush1.msra.mxu0 %v382
    %461 = vmatprep.subr.mxu0 %v385
    %462 = vmatpush1.msra.mxu0 %v384
    %463 = vmatprep.subr.mxu0 %v387
    %464 = vmatpush1.msra.mxu0 %v386
    %465 = vmatprep.subr.mxu0 %v389
    %466 = vmatpush1.msra.mxu0 %v388
    %467 = vmatprep.subr.mxu0 %v391
    %468 = vmatpush1.msra.mxu0 %v390
    %469 = vmatprep.subr.mxu0 %v393
    %470 = vmatpush1.msra.mxu0 %v392
    %471 = vmatprep.subr.mxu0 %v395
    %472 = vmatpush1.msra.mxu0 %v394
    %473 = vmatprep.subr.mxu0 %v397
    %474 = vmatpush1.msra.mxu0 %v396
    %475 = vmatprep.subr.mxu0 %v399
    %476 = vmatpush1.msra.mxu0 %v398
    %477 = vmatprep.subr.mxu0 %v401
    %478 = vmatpush1.msra.mxu0 %v400
    %479 = vmatprep.subr.mxu0 %v403
    %480 = vmatpush1.msra.mxu0 %v402
    %481 = vmatprep.subr.mxu0 %v405
    %482 = vmatpush1.msra.mxu0 %v404
    %483 = vmatprep.subr.mxu0 %v407
    %484 = vmatpush1.msra.mxu0 %v406
    %485 = vmatprep.subr.mxu0 %v409
    %486 = vmatpush1.msra.mxu0 %v408
    %487 = vmatprep.subr.mxu0 %v411
    %488 = vmatpush1.msra.mxu0 %v410
    %489 = vmatprep.subr.mxu0 %v413
    %490 = vmatpush1.msra.mxu0 %v412
    %491 = vmatprep.subr.mxu0 %v415
    %492 = vmatpush1.msra.mxu0 %v414
    %493 = vmatprep.subr.mxu0 %v417
    %494 = vmatpush1.msra.mxu0 %v416
    %495 = vmatprep.subr.mxu0 %v419
    %496 = vmatpush1.msra.mxu0 %v418
    %497 = vmatprep.subr.mxu0 %v421
    %498 = vmatpush1.msra.mxu0 %v420
    %499 = vmatprep.subr.mxu0 %v423
    %500 = vmatpush1.msra.mxu0 %v422
    %501 = vmatprep.mubr.f32.mxu0 %v358
    %502 = vmatmul.mubr.f32.gmra.mrb[0].mxu0 %v357
    %v503 = vpop.f32.mrb[0].mxu0
    %v504 = vadd.f32 %v430, %v503
    %v505 = vpop.f32.mrb[0].mxu0
    %v506 = vadd.f32 %v434, %v505
    %507 = vdwg.mxu0
    %vm508 = vcmp.gt.f32.partialorder %v504, 0.0
    %vm509 = vcmp.gt.f32.partialorder %v506, 0.0
    %v510 = vmul.f32 %v504, 1.442695
    %v511 = vpow.pop %v510
    %v512 = vmul.f32 %v506, 1.442695
    %v513 = vpow.pop %v512
    %v514 = vsub.f32 %v511, 1.0
    %v515 = vsub.f32 %v513, 1.0
    %v516 = vmul.f32 %v514, 1.6732632
    %v517 = vmul.f32 %v515, 1.6732632
    %v518 = vsel %vm508, %v504, %v516
    %v519 = vsel %vm509, %v506, %v517
    %v520 = vmul.f32 %v518, 1.050701
    %v521 = vmul.f32 %v519, 1.050701
    %s522 = scalar_lea.vmem [#allocation7], 1024
    %v523 = vld [vmem:[%s522] sm:$0xff]
    %v524 = vld [vmem:[%s522 + $0x8] sm:$0xff]
    %v525 = vld [vmem:[%s522 + $0x10] sm:$0xff]
    %v526 = vld [vmem:[%s522 + $0x18] sm:$0xff]
    %v527 = vld [vmem:[%s522 + $0x20] sm:$0xff]
    %v528 = vld [vmem:[%s522 + $0x28] sm:$0xff]
    %v529 = vld [vmem:[%s522 + $0x30] sm:$0xff]
    %v530 = vld [vmem:[%s522 + $0x38] sm:$0xff]
    %v531 = vld [vmem:[%s522 + $0x40] sm:$0xff]
    %v532 = vld [vmem:[%s522 + $0x48] sm:$0xff]
    %v533 = vld [vmem:[%s522 + $0x50] sm:$0xff]
    %v534 = vld [vmem:[%s522 + $0x58] sm:$0xff]
    %v535 = vld [vmem:[%s522 + $0x60] sm:$0xff]
    %v536 = vld [vmem:[%s522 + $0x68] sm:$0xff]
    %v537 = vld [vmem:[%s522 + $0x70] sm:$0xff]
    %v538 = vld [vmem:[%s522 + $0x78] sm:$0xff]
    %v539 = vld [vmem:[%s522 + $0x80] sm:$0xff]
    %v540 = vld [vmem:[%s522 + $0x88] sm:$0xff]
    %v541 = vld [vmem:[%s522 + $0x90] sm:$0xff]
    %v542 = vld [vmem:[%s522 + $0x98] sm:$0xff]
    %v543 = vld [vmem:[%s522 + $0xa0] sm:$0xff]
    %v544 = vld [vmem:[%s522 + $0xa8] sm:$0xff]
    %v545 = vld [vmem:[%s522 + $0xb0] sm:$0xff]
    %v546 = vld [vmem:[%s522 + $0xb8] sm:$0xff]
    %v547 = vld [vmem:[%s522 + $0xc0] sm:$0xff]
    %v548 = vld [vmem:[%s522 + $0xc8] sm:$0xff]
    %v549 = vld [vmem:[%s522 + $0xd0] sm:$0xff]
    %v550 = vld [vmem:[%s522 + $0xd8] sm:$0xff]
    %v551 = vld [vmem:[%s522 + $0xe0] sm:$0xff]
    %v552 = vld [vmem:[%s522 + $0xe8] sm:$0xff]
    %v553 = vld [vmem:[%s522 + $0xf0] sm:$0xff]
    %v554 = vld [vmem:[%s522 + $0xf8] sm:$0xff]
    %v555 = vld [vmem:[%s522 + $0x100] sm:$0xff]
    %v556 = vld [vmem:[%s522 + $0x108] sm:$0xff]
    %v557 = vld [vmem:[%s522 + $0x110] sm:$0xff]
    %v558 = vld [vmem:[%s522 + $0x118] sm:$0xff]
    %v559 = vld [vmem:[%s522 + $0x120] sm:$0xff]
    %v560 = vld [vmem:[%s522 + $0x128] sm:$0xff]
    %v561 = vld [vmem:[%s522 + $0x130] sm:$0xff]
    %v562 = vld [vmem:[%s522 + $0x138] sm:$0xff]
    %v563 = vld [vmem:[%s522 + $0x140] sm:$0xff]
    %v564 = vld [vmem:[%s522 + $0x148] sm:$0xff]
    %v565 = vld [vmem:[%s522 + $0x150] sm:$0xff]
    %v566 = vld [vmem:[%s522 + $0x158] sm:$0xff]
    %v567 = vld [vmem:[%s522 + $0x160] sm:$0xff]
    %v568 = vld [vmem:[%s522 + $0x168] sm:$0xff]
    %v569 = vld [vmem:[%s522 + $0x170] sm:$0xff]
    %v570 = vld [vmem:[%s522 + $0x178] sm:$0xff]
    %v571 = vld [vmem:[%s522 + $0x180] sm:$0xff]
    %v572 = vld [vmem:[%s522 + $0x188] sm:$0xff]
    %v573 = vld [vmem:[%s522 + $0x190] sm:$0xff]
    %v574 = vld [vmem:[%s522 + $0x198] sm:$0xff]
    %v575 = vld [vmem:[%s522 + $0x1a0] sm:$0xff]
    %v576 = vld [vmem:[%s522 + $0x1a8] sm:$0xff]
    %v577 = vld [vmem:[%s522 + $0x1b0] sm:$0xff]
    %v578 = vld [vmem:[%s522 + $0x1b8] sm:$0xff]
    %v579 = vld [vmem:[%s522 + $0x1c0] sm:$0xff]
    %v580 = vld [vmem:[%s522 + $0x1c8] sm:$0xff]
    %v581 = vld [vmem:[%s522 + $0x1d0] sm:$0xff]
    %v582 = vld [vmem:[%s522 + $0x1d8] sm:$0xff]
    %v583 = vld [vmem:[%s522 + $0x1e0] sm:$0xff]
    %v584 = vld [vmem:[%s522 + $0x1e8] sm:$0xff]
    %v585 = vld [vmem:[%s522 + $0x1f0] sm:$0xff]
    %v586 = vld [vmem:[%s522 + $0x1f8] sm:$0xff]
    %s587 = scalar_lea.vmem %s4, 4
    %v588 = vld [vmem:[%s587] sm:$0x3]
    %v590 = vlaneseq
    %v591 = vshrl.u32 %v590, 7
    %v592 = vsub.s32 0, %v591
    %v593 = vrot.slane %v588, %v592
    %v594 = vlaneseq
    %v595 = vshrl.u32 %v594, 7
    %v596 = vsub.s32 1, %v595
    %v597 = vrot.slane %v588, %v596
    %600 = vmatprep.subr.mxu0 %v524
    %601 = vmatpush1.msra.mxu0 %v523
    %602 = vmatprep.subr.mxu0 %v526
    %603 = vmatpush1.msra.mxu0 %v525
    %604 = vmatprep.subr.mxu0 %v528
    %605 = vmatpush1.msra.mxu0 %v527
    %606 = vmatprep.subr.mxu0 %v530
    %607 = vmatpush1.msra.mxu0 %v529
    %608 = vmatprep.subr.mxu0 %v532
    %609 = vmatpush1.msra.mxu0 %v531
    %610 = vmatprep.subr.mxu0 %v534
    %611 = vmatpush1.msra.mxu0 %v533
    %612 = vmatprep.subr.mxu0 %v536
    %613 = vmatpush1.msra.mxu0 %v535
    %614 = vmatprep.subr.mxu0 %v538
    %615 = vmatpush1.msra.mxu0 %v537
    %616 = vmatprep.subr.mxu0 %v540
    %617 = vmatpush1.msra.mxu0 %v539
    %618 = vmatprep.subr.mxu0 %v542
    %619 = vmatpush1.msra.mxu0 %v541
    %620 = vmatprep.subr.mxu0 %v544
    %621 = vmatpush1.msra.mxu0 %v543
    %622 = vmatprep.subr.mxu0 %v546
    %623 = vmatpush1.msra.mxu0 %v545
    %624 = vmatprep.subr.mxu0 %v548
    %625 = vmatpush1.msra.mxu0 %v547
    %626 = vmatprep.subr.mxu0 %v550
    %627 = vmatpush1.msra.mxu0 %v549
    %628 = vmatprep.subr.mxu0 %v552
    %629 = vmatpush1.msra.mxu0 %v551
    %630 = vmatprep.subr.mxu0 %v554
    %631 = vmatpush1.msra.mxu0 %v553
    %632 = vmatprep.subr.mxu0 %v556
    %633 = vmatpush1.msra.mxu0 %v555
    %634 = vmatprep.subr.mxu0 %v558
    %635 = vmatpush1.msra.mxu0 %v557
    %636 = vmatprep.subr.mxu0 %v560
    %637 = vmatpush1.msra.mxu0 %v559
    %638 = vmatprep.subr.mxu0 %v562
    %639 = vmatpush1.msra.mxu0 %v561
    %640 = vmatprep.subr.mxu0 %v564
    %641 = vmatpush1.msra.mxu0 %v563
    %642 = vmatprep.subr.mxu0 %v566
    %643 = vmatpush1.msra.mxu0 %v565
    %644 = vmatprep.subr.mxu0 %v568
    %645 = vmatpush1.msra.mxu0 %v567
    %646 = vmatprep.subr.mxu0 %v570
    %647 = vmatpush1.msra.mxu0 %v569
    %648 = vmatprep.subr.mxu0 %v572
    %649 = vmatpush1.msra.mxu0 %v571
    %650 = vmatprep.subr.mxu0 %v574
    %651 = vmatpush1.msra.mxu0 %v573
    %652 = vmatprep.subr.mxu0 %v576
    %653 = vmatpush1.msra.mxu0 %v575
    %654 = vmatprep.subr.mxu0 %v578
    %655 = vmatpush1.msra.mxu0 %v577
    %656 = vmatprep.subr.mxu0 %v580
    %657 = vmatpush1.msra.mxu0 %v579
    %658 = vmatprep.subr.mxu0 %v582
    %659 = vmatpush1.msra.mxu0 %v581
    %660 = vmatprep.subr.mxu0 %v584
    %661 = vmatpush1.msra.mxu0 %v583
    %662 = vmatprep.subr.mxu0 %v586
    %663 = vmatpush1.msra.mxu0 %v585
    %664 = vmatprep.mubr.f32.mxu0 %v521
    %665 = vmatmul.mubr.f32.gmra.mrb[0].mxu0 %v520
    %v666 = vpop.f32.mrb[0].mxu0
    %v667 = vadd.f32 %v593, %v666
    %v668 = vpop.f32.mrb[0].mxu0
    %v669 = vadd.f32 %v597, %v668
    %670 = vdwg.mxu0
    %vm671 = vcmp.gt.f32.partialorder %v667, 0.0
    %vm672 = vcmp.gt.f32.partialorder %v669, 0.0
    %v673 = vmul.f32 %v667, 1.442695
    %v674 = vpow.pop %v673
    %v675 = vmul.f32 %v669, 1.442695
    %v676 = vpow.pop %v675
    %v677 = vsub.f32 %v674, 1.0
    %v678 = vsub.f32 %v676, 1.0
    %v679 = vmul.f32 %v677, 1.6732632
    %v680 = vmul.f32 %v678, 1.6732632
    %v681 = vsel %vm671, %v667, %v679
    %v682 = vsel %vm672, %v669, %v680
    %v683 = vmul.f32 %v681, 1.050701
    %v684 = vmul.f32 %v682, 1.050701
    %s685 = scalar_lea.vmem [#allocation7], 1536
    %v686 = vld [vmem:[%s685] sm:$0xff]
    %v687 = vld [vmem:[%s685 + $0x8] sm:$0xff]
    %v688 = vld [vmem:[%s685 + $0x10] sm:$0xff]
    %v689 = vld [vmem:[%s685 + $0x18] sm:$0xff]
    %v690 = vld [vmem:[%s685 + $0x20] sm:$0xff]
    %v691 = vld [vmem:[%s685 + $0x28] sm:$0xff]
    %v692 = vld [vmem:[%s685 + $0x30] sm:$0xff]
    %v693 = vld [vmem:[%s685 + $0x38] sm:$0xff]
    %v694 = vld [vmem:[%s685 + $0x40] sm:$0xff]
    %v695 = vld [vmem:[%s685 + $0x48] sm:$0xff]
    %v696 = vld [vmem:[%s685 + $0x50] sm:$0xff]
    %v697 = vld [vmem:[%s685 + $0x58] sm:$0xff]
    %v698 = vld [vmem:[%s685 + $0x60] sm:$0xff]
    %v699 = vld [vmem:[%s685 + $0x68] sm:$0xff]
    %v700 = vld [vmem:[%s685 + $0x70] sm:$0xff]
    %v701 = vld [vmem:[%s685 + $0x78] sm:$0xff]
    %v702 = vld [vmem:[%s685 + $0x80] sm:$0xff]
    %v703 = vld [vmem:[%s685 + $0x88] sm:$0xff]
    %v704 = vld [vmem:[%s685 + $0x90] sm:$0xff]
    %v705 = vld [vmem:[%s685 + $0x98] sm:$0xff]
    %v706 = vld [vmem:[%s685 + $0xa0] sm:$0xff]
    %v707 = vld [vmem:[%s685 + $0xa8] sm:$0xff]
    %v708 = vld [vmem:[%s685 + $0xb0] sm:$0xff]
    %v709 = vld [vmem:[%s685 + $0xb8] sm:$0xff]
    %v710 = vld [vmem:[%s685 + $0xc0] sm:$0xff]
    %v711 = vld [vmem:[%s685 + $0xc8] sm:$0xff]
    %v712 = vld [vmem:[%s685 + $0xd0] sm:$0xff]
    %v713 = vld [vmem:[%s685 + $0xd8] sm:$0xff]
    %v714 = vld [vmem:[%s685 + $0xe0] sm:$0xff]
    %v715 = vld [vmem:[%s685 + $0xe8] sm:$0xff]
    %v716 = vld [vmem:[%s685 + $0xf0] sm:$0xff]
    %v717 = vld [vmem:[%s685 + $0xf8] sm:$0xff]
    %v718 = vld [vmem:[%s685 + $0x100] sm:$0xff]
    %v719 = vld [vmem:[%s685 + $0x108] sm:$0xff]
    %v720 = vld [vmem:[%s685 + $0x110] sm:$0xff]
    %v721 = vld [vmem:[%s685 + $0x118] sm:$0xff]
    %v722 = vld [vmem:[%s685 + $0x120] sm:$0xff]
    %v723 = vld [vmem:[%s685 + $0x128] sm:$0xff]
    %v724 = vld [vmem:[%s685 + $0x130] sm:$0xff]
    %v725 = vld [vmem:[%s685 + $0x138] sm:$0xff]
    %v726 = vld [vmem:[%s685 + $0x140] sm:$0xff]
    %v727 = vld [vmem:[%s685 + $0x148] sm:$0xff]
    %v728 = vld [vmem:[%s685 + $0x150] sm:$0xff]
    %v729 = vld [vmem:[%s685 + $0x158] sm:$0xff]
    %v730 = vld [vmem:[%s685 + $0x160] sm:$0xff]
    %v731 = vld [vmem:[%s685 + $0x168] sm:$0xff]
    %v732 = vld [vmem:[%s685 + $0x170] sm:$0xff]
    %v733 = vld [vmem:[%s685 + $0x178] sm:$0xff]
    %v734 = vld [vmem:[%s685 + $0x180] sm:$0xff]
    %v735 = vld [vmem:[%s685 + $0x188] sm:$0xff]
    %v736 = vld [vmem:[%s685 + $0x190] sm:$0xff]
    %v737 = vld [vmem:[%s685 + $0x198] sm:$0xff]
    %v738 = vld [vmem:[%s685 + $0x1a0] sm:$0xff]
    %v739 = vld [vmem:[%s685 + $0x1a8] sm:$0xff]
    %v740 = vld [vmem:[%s685 + $0x1b0] sm:$0xff]
    %v741 = vld [vmem:[%s685 + $0x1b8] sm:$0xff]
    %v742 = vld [vmem:[%s685 + $0x1c0] sm:$0xff]
    %v743 = vld [vmem:[%s685 + $0x1c8] sm:$0xff]
    %v744 = vld [vmem:[%s685 + $0x1d0] sm:$0xff]
    %v745 = vld [vmem:[%s685 + $0x1d8] sm:$0xff]
    %v746 = vld [vmem:[%s685 + $0x1e0] sm:$0xff]
    %v747 = vld [vmem:[%s685 + $0x1e8] sm:$0xff]
    %v748 = vld [vmem:[%s685 + $0x1f0] sm:$0xff]
    %v749 = vld [vmem:[%s685 + $0x1f8] sm:$0xff]
    %s750 = scalar_lea.vmem %s4, 6
    %v751 = vld [vmem:[%s750] sm:$0x3]
    %v753 = vlaneseq
    %v754 = vshrl.u32 %v753, 7
    %v755 = vsub.s32 0, %v754
    %v756 = vrot.slane %v751, %v755
    %v757 = vlaneseq
    %v758 = vshrl.u32 %v757, 7
    %v759 = vsub.s32 1, %v758
    %v760 = vrot.slane %v751, %v759
    %763 = vmatprep.subr.mxu0 %v687
    %764 = vmatpush1.msra.mxu0 %v686
    %765 = vmatprep.subr.mxu0 %v689
    %766 = vmatpush1.msra.mxu0 %v688
    %767 = vmatprep.subr.mxu0 %v691
    %768 = vmatpush1.msra.mxu0 %v690
    %769 = vmatprep.subr.mxu0 %v693
    %770 = vmatpush1.msra.mxu0 %v692
    %771 = vmatprep.subr.mxu0 %v695
    %772 = vmatpush1.msra.mxu0 %v694
    %773 = vmatprep.subr.mxu0 %v697
    %774 = vmatpush1.msra.mxu0 %v696
    %775 = vmatprep.subr.mxu0 %v699
    %776 = vmatpush1.msra.mxu0 %v698
    %777 = vmatprep.subr.mxu0 %v701
    %778 = vmatpush1.msra.mxu0 %v700
    %779 = vmatprep.subr.mxu0 %v703
    %780 = vmatpush1.msra.mxu0 %v702
    %781 = vmatprep.subr.mxu0 %v705
    %782 = vmatpush1.msra.mxu0 %v704
    %783 = vmatprep.subr.mxu0 %v707
    %784 = vmatpush1.msra.mxu0 %v706
    %785 = vmatprep.subr.mxu0 %v709
    %786 = vmatpush1.msra.mxu0 %v708
    %787 = vmatprep.subr.mxu0 %v711
    %788 = vmatpush1.msra.mxu0 %v710
    %789 = vmatprep.subr.mxu0 %v713
    %790 = vmatpush1.msra.mxu0 %v712
    %791 = vmatprep.subr.mxu0 %v715
    %792 = vmatpush1.msra.mxu0 %v714
    %793 = vmatprep.subr.mxu0 %v717
    %794 = vmatpush1.msra.mxu0 %v716
    %795 = vmatprep.subr.mxu0 %v719
    %796 = vmatpush1.msra.mxu0 %v718
    %797 = vmatprep.subr.mxu0 %v721
    %798 = vmatpush1.msra.mxu0 %v720
    %799 = vmatprep.subr.mxu0 %v723
    %800 = vmatpush1.msra.mxu0 %v722
    %801 = vmatprep.subr.mxu0 %v725
    %802 = vmatpush1.msra.mxu0 %v724
    %803 = vmatprep.subr.mxu0 %v727
    %804 = vmatpush1.msra.mxu0 %v726
    %805 = vmatprep.subr.mxu0 %v729
    %806 = vmatpush1.msra.mxu0 %v728
    %807 = vmatprep.subr.mxu0 %v731
    %808 = vmatpush1.msra.mxu0 %v730
    %809 = vmatprep.subr.mxu0 %v733
    %810 = vmatpush1.msra.mxu0 %v732
    %811 = vmatprep.subr.mxu0 %v735
    %812 = vmatpush1.msra.mxu0 %v734
    %813 = vmatprep.subr.mxu0 %v737
    %814 = vmatpush1.msra.mxu0 %v736
    %815 = vmatprep.subr.mxu0 %v739
    %816 = vmatpush1.msra.mxu0 %v738
    %817 = vmatprep.subr.mxu0 %v741
    %818 = vmatpush1.msra.mxu0 %v740
    %819 = vmatprep.subr.mxu0 %v743
    %820 = vmatpush1.msra.mxu0 %v742
    %821 = vmatprep.subr.mxu0 %v745
    %822 = vmatpush1.msra.mxu0 %v744
    %823 = vmatprep.subr.mxu0 %v747
    %824 = vmatpush1.msra.mxu0 %v746
    %825 = vmatprep.subr.mxu0 %v749
    %826 = vmatpush1.msra.mxu0 %v748
    %827 = vmatprep.mubr.f32.mxu0 %v684
    %828 = vmatmul.mubr.f32.gmra.mrb[0].mxu0 %v683
    %v829 = vpop.f32.mrb[0].mxu0
    %v830 = vadd.f32 %v756, %v829
    %v831 = vpop.f32.mrb[0].mxu0
    %v832 = vadd.f32 %v760, %v831
    %833 = vdwg.mxu0
    %vm834 = vcmp.gt.f32.partialorder %v830, 0.0
    %vm835 = vcmp.gt.f32.partialorder %v832, 0.0
    %v836 = vmul.f32 %v830, 1.442695
    %v837 = vpow.pop %v836
    %v838 = vmul.f32 %v832, 1.442695
    %v839 = vpow.pop %v838
    %v840 = vsub.f32 %v837, 1.0
    %v841 = vsub.f32 %v839, 1.0
    %v842 = vmul.f32 %v840, 1.6732632
    %v843 = vmul.f32 %v841, 1.6732632
    %v844 = vsel %vm834, %v830, %v842
    %v845 = vsel %vm835, %v832, %v843
    %v846 = vmul.f32 %v844, 1.050701
    %v847 = vmul.f32 %v845, 1.050701
    %v848 = vld [vmem:[#allocation8] sm:$0xff]
    %v849 = vld [vmem:[#allocation8 + $0x8] sm:$0xff]
    %v850 = vld [vmem:[#allocation8 + $0x10] sm:$0xff]
    %v851 = vld [vmem:[#allocation8 + $0x18] sm:$0xff]
    %v852 = vld [vmem:[#allocation8 + $0x20] sm:$0xff]
    %v853 = vld [vmem:[#allocation8 + $0x28] sm:$0xff]
    %v854 = vld [vmem:[#allocation8 + $0x30] sm:$0xff]
    %v855 = vld [vmem:[#allocation8 + $0x38] sm:$0xff]
    %v856 = vld [vmem:[#allocation8 + $0x40] sm:$0xff]
    %v857 = vld [vmem:[#allocation8 + $0x48] sm:$0xff]
    %v858 = vld [vmem:[#allocation8 + $0x50] sm:$0xff]
    %v859 = vld [vmem:[#allocation8 + $0x58] sm:$0xff]
    %v860 = vld [vmem:[#allocation8 + $0x60] sm:$0xff]
    %v861 = vld [vmem:[#allocation8 + $0x68] sm:$0xff]
    %v862 = vld [vmem:[#allocation8 + $0x70] sm:$0xff]
    %v863 = vld [vmem:[#allocation8 + $0x78] sm:$0xff]
    %v864 = vld [vmem:[#allocation8 + $0x80] sm:$0xff]
    %v865 = vld [vmem:[#allocation8 + $0x88] sm:$0xff]
    %v866 = vld [vmem:[#allocation8 + $0x90] sm:$0xff]
    %v867 = vld [vmem:[#allocation8 + $0x98] sm:$0xff]
    %v868 = vld [vmem:[#allocation8 + $0xa0] sm:$0xff]
    %v869 = vld [vmem:[#allocation8 + $0xa8] sm:$0xff]
    %v870 = vld [vmem:[#allocation8 + $0xb0] sm:$0xff]
    %v871 = vld [vmem:[#allocation8 + $0xb8] sm:$0xff]
    %v872 = vld [vmem:[#allocation8 + $0xc0] sm:$0xff]
    %v873 = vld [vmem:[#allocation8 + $0xc8] sm:$0xff]
    %v874 = vld [vmem:[#allocation8 + $0xd0] sm:$0xff]
    %v875 = vld [vmem:[#allocation8 + $0xd8] sm:$0xff]
    %v876 = vld [vmem:[#allocation8 + $0xe0] sm:$0xff]
    %v877 = vld [vmem:[#allocation8 + $0xe8] sm:$0xff]
    %v878 = vld [vmem:[#allocation8 + $0xf0] sm:$0xff]
    %v879 = vld [vmem:[#allocation8 + $0xf8] sm:$0xff]
    %v880 = vld [vmem:[%s6] sm:$0x1]
    %v882 = vlaneseq
    %v883 = vshrl.u32 %v882, 7
    %v884 = vsub.s32 0, %v883
    %v885 = vrot.slane %v880, %v884
    %887 = vmatprep.subr.mxu0 0.0
    %888 = vmatpush1.msra.mxu0 %v848
    %889 = vmatprep.subr.mxu0 0.0
    %890 = vmatpush1.msra.mxu0 %v849
    %891 = vmatprep.subr.mxu0 0.0
    %892 = vmatpush1.msra.mxu0 %v850
    %893 = vmatprep.subr.mxu0 0.0
    %894 = vmatpush1.msra.mxu0 %v851
    %895 = vmatprep.subr.mxu0 0.0
    %896 = vmatpush1.msra.mxu0 %v852
    %897 = vmatprep.subr.mxu0 0.0
    %898 = vmatpush1.msra.mxu0 %v853
    %899 = vmatprep.subr.mxu0 0.0
    %900 = vmatpush1.msra.mxu0 %v854
    %901 = vmatprep.subr.mxu0 0.0
    %902 = vmatpush1.msra.mxu0 %v855
    %903 = vmatprep.subr.mxu0 0.0
    %904 = vmatpush1.msra.mxu0 %v856
    %905 = vmatprep.subr.mxu0 0.0
    %906 = vmatpush1.msra.mxu0 %v857
    %907 = vmatprep.subr.mxu0 0.0
    %908 = vmatpush1.msra.mxu0 %v858
    %909 = vmatprep.subr.mxu0 0.0
    %910 = vmatpush1.msra.mxu0 %v859
    %911 = vmatprep.subr.mxu0 0.0
    %912 = vmatpush1.msra.mxu0 %v860
    %913 = vmatprep.subr.mxu0 0.0
    %914 = vmatpush1.msra.mxu0 %v861
    %915 = vmatprep.subr.mxu0 0.0
    %916 = vmatpush1.msra.mxu0 %v862
    %917 = vmatprep.subr.mxu0 0.0
    %918 = vmatpush1.msra.mxu0 %v863
    %919 = vmatprep.subr.mxu0 0.0
    %920 = vmatpush1.msra.mxu0 %v864
    %921 = vmatprep.subr.mxu0 0.0
    %922 = vmatpush1.msra.mxu0 %v865
    %923 = vmatprep.subr.mxu0 0.0
    %924 = vmatpush1.msra.mxu0 %v866
    %925 = vmatprep.subr.mxu0 0.0
    %926 = vmatpush1.msra.mxu0 %v867
    %927 = vmatprep.subr.mxu0 0.0
    %928 = vmatpush1.msra.mxu0 %v868
    %929 = vmatprep.subr.mxu0 0.0
    %930 = vmatpush1.msra.mxu0 %v869
    %931 = vmatprep.subr.mxu0 0.0
    %932 = vmatpush1.msra.mxu0 %v870
    %933 = vmatprep.subr.mxu0 0.0
    %934 = vmatpush1.msra.mxu0 %v871
    %935 = vmatprep.subr.mxu0 0.0
    %936 = vmatpush1.msra.mxu0 %v872
    %937 = vmatprep.subr.mxu0 0.0
    %938 = vmatpush1.msra.mxu0 %v873
    %939 = vmatprep.subr.mxu0 0.0
    %940 = vmatpush1.msra.mxu0 %v874
    %941 = vmatprep.subr.mxu0 0.0
    %942 = vmatpush1.msra.mxu0 %v875
    %943 = vmatprep.subr.mxu0 0.0
    %944 = vmatpush1.msra.mxu0 %v876
    %945 = vmatprep.subr.mxu0 0.0
    %946 = vmatpush1.msra.mxu0 %v877
    %947 = vmatprep.subr.mxu0 0.0
    %948 = vmatpush1.msra.mxu0 %v878
    %949 = vmatprep.subr.mxu0 0.0
    %950 = vmatpush1.msra.mxu0 %v879
    %951 = vmatprep.mubr.f32.mxu0 %v847
    %952 = vmatmul.mubr.f32.gmra.mrb[0].mxu0 %v846
    %v953 = vpop.f32.mrb[0].mxu0
    %v954 = vadd.f32 %v885, %v953
    %v955 = vpop.f32.mrb[0].mxu0
    %956 = vdwg.mxu0
    %957 = vst [vmem:[#allocation10] sm:$0xff] %v954
    // Predicated region
    $region46: #{tpu_custom_call.1} parent=1 // pred_check
      _
    $region47: #{tpu_custom_call.1} parent=1 // pred_check_branch
      %959 = sbr.rel (0) target = $region49
    $region48: #{tpu_custom_call.1} parent=1 // pred_region
      %s961 = ssub.s32 128, 128
      %962 = vsyncadd [#allocation4], %s961
      %s964 = sshll.u32 [#allocation10], 4
      %s965 = int_to_ptr.vmem [resolvable:$true] %s964
      %967 = dma.vmem_to_hbm [thread:$0]  %s965, 128, %s7, [#allocation4]
    $region49: #{tpu_custom_call.1} parent=1 // pred_fallthru
      _
    // Predicated region
    $region50: #{tpu_custom_call.1} parent=1 // pred_check
      _
    $region51: #{tpu_custom_call.1} parent=1 // pred_check_branch
      %969 = sbr.rel (0) target = $region53
    $region52: #{tpu_custom_call.1} parent=1 // pred_region
      %970 = dma.done [#allocation4], 128
    $region53: #{tpu_custom_call.1} parent=1 // pred_fallthru
      _
    %971 = vsyncpa [#allocation3], 1
    %972 = vsyncpa [#allocation6], 1
    %973 = vsyncpa [#allocation9], 1
    %974 = vsyncpa [#allocation4], 1

</llo_original>
